<compile_context>
chip_gen: v7x
topology: tpu7x:2x2x1
jax: 0.10.0
libtpu: 0.0.40
codegen_flags: <defaults>
</compile_context>

<pallas_src>
import jax
import jax.numpy as jnp
from jax.experimental import pallas as pl
from jax.experimental.pallas import tpu as pltpu

BN_EPS = 1e-5


def _enc_kernel(x_ref, p_ref, o_ref):
    # x_ref: (2, N, HW)        both tracks in one block (single invocation)
    # p_ref: (3, Cout, 1)      rows = [conv weight w, bn gamma, bn beta], column-shaped
    # o_ref: (2, N*Cout, HW)   row n*Cout + c  ->  reshapes to NCHW (2N, Cout, H, W)
    n_track, n, hw = x_ref.shape
    cout = p_ref.shape[1]

    w = p_ref[0]        # (Cout, 1)
    gamma = p_ref[1]    # (Cout, 1)
    beta = p_ref[2]     # (Cout, 1)

    inv_m = 1.0 / (n * hw)

    # Static unroll over the 2 tracks: BN stats must stay per-track
    # (matches two separate encoder_track() calls in training mode).
    for t in range(n_track):
        x_t = x_ref[t].astype(jnp.float32)                       # (N, HW)

        # Biased batch stats over (N, H, W) — computed on x only (Cin == 1).
        mean = jnp.sum(jnp.sum(x_t, axis=1, keepdims=True),
                       axis=0, keepdims=True) * inv_m             # (1, 1)
        d = x_t - mean                                             # (N, HW)
        var = jnp.sum(jnp.sum(d * d, axis=1, keepdims=True),
                      axis=0, keepdims=True) * inv_m               # (1, 1)

        # Fold 1x1 conv (per-channel scale, Cin==1) + BN normalize + BN affine
        # into one per-channel scale.  EUP rsqrt on a (Cout,1) vector.
        scale = gamma * w * jax.lax.rsqrt(w * w * var + BN_EPS)    # (Cout, 1)

        # Build the packed (N*Cout, HW) slab: rows ordered n-major, c-minor.
        rows = [scale * d[i:i + 1, :] + beta for i in range(n)]    # each (Cout, HW)
        slab = jnp.concatenate(rows, axis=0)                       # (N*Cout, HW)

        # ReLU; MaxPool2d(1) is identity.  One dense, lane-full store per track.
        o_ref[t] = jnp.maximum(slab, 0.0).astype(o_ref.dtype)


def encoder_sub_track_a(a, b, params):
    """forward(a, b): a, b are (N, 1, H, W) -> (2N, Cout, H, W)."""
    N, Cin, H, W = a.shape
    assert Cin == 1, "EncoderSubTrackA first EncMod expects Cin == 1"
    HW = H * W
    assert HW % 128 == 0, "keep spatial dim lane-dense (see TODO above)"
    Cout = params["w"].shape[0]

    # (N, 1, H, W) -> (N, H*W): pure reshape (Cin == 1), no transpose / no copy.
    x = jnp.stack([a.reshape(N, HW), b.reshape(N, HW)], axis=0)    # (2, N, HW)

    # Merge conv weight + BN affine into a single (3, Cout, 1) block -> one DMA.
    p = jnp.stack([params["w"].reshape(Cout, 1).astype(jnp.float32),
                   params["gamma"].reshape(Cout, 1).astype(jnp.float32),
                   params["beta"].reshape(Cout, 1).astype(jnp.float32)], axis=0)

    out = pl.pallas_call(
        _enc_kernel,
        out_shape=jax.ShapeDtypeStruct((2, N * Cout, HW), a.dtype),
        # No grid: single kernel invocation, whole problem in one VMEM block.
        in_specs=[
            pl.BlockSpec((2, N, HW), lambda: (0, 0, 0)),
            pl.BlockSpec((3, Cout, 1), lambda: (0, 0, 0)),
        ],
        out_specs=pl.BlockSpec((2, N * Cout, HW), lambda: (0, 0, 0)),
        compiler_params=pltpu.CompilerParams(vmem_limit_bytes=32 * 1024 * 1024),
    )(x, p)

    # (2, N*Cout, H*W) -> (2N, Cout, H, W): free row-major reshape == torch.concat.
    return out.reshape(2 * N, Cout, H, W)


def _reference(a, b, params):
    """Pure-JAX reference of the PyTorch forward (training-mode BN)."""
    w = params["w"].reshape(-1, 1)                  # (Cout, Cin=1)
    gamma = params["gamma"].reshape(1, -1)          # (1, Cout)
    beta = params["beta"].reshape(1, -1)

    def track(x):
        N, Cin, H, W = x.shape
        x2d = jnp.transpose(x, (0, 2, 3, 1)).reshape(-1, Cin)    # (M, Cin)
        y = x2d @ w.T                                            # (M, Cout)
        mean = jnp.mean(y, axis=0, keepdims=True)
        var = jnp.mean((y - mean) ** 2, axis=0, keepdims=True)
        y = gamma * (y - mean) / jnp.sqrt(var + BN_EPS) + beta
        y = jnp.maximum(y, 0.0)
        return jnp.transpose(y.reshape(N, H, W, -1), (0, 3, 1, 2))

    return jnp.concatenate((track(a), track(b)), axis=0)


if __name__ == "__main__":
    key = jax.random.PRNGKey(0)
    k_a, k_b, k_w = jax.random.split(key, 3)

    # EncoderSubTrackA first (only) EncMod: Cin=1, Cout=4
    Cin, Cout = 1, 4
    N, H, W = 2, 16, 16

    a = jax.random.normal(k_a, (N, Cin, H, W), dtype=jnp.float32)
    b = jax.random.normal(k_b, (N, Cin, H, W), dtype=jnp.float32)

    # Deterministic synthetic parameters.
    # Conv2d weight (Cout, Cin, 1, 1) stored squeezed as (Cout, Cin) = (Cout, 1).
    params = {
        "w": (jax.random.normal(k_w, (Cout, Cin), dtype=jnp.float32) * 0.5),
        "gamma": (1.0 + 0.1 * jnp.arange(Cout, dtype=jnp.float32)).reshape(Cout, 1),
        "beta": (0.05 * jnp.arange(Cout, dtype=jnp.float32)).reshape(Cout, 1),
    }

    out = encoder_sub_track_a(a, b, params)
    out = jax.block_until_ready(out)

    ref = _reference(a, b, params)
    assert out.shape == (2 * N, Cout, H, W), out.shape
    assert jnp.allclose(out, ref, atol=1e-4, rtol=1e-4), "mismatch vs reference"

    print("KERNEL_OK")
</pallas_src>

<mosaic_0001>
module attributes {stable_mosaic.version = 11 : i64} {
  func.func @_enc_kernel(%arg0: memref<2x2x256xf32, #tpu.memory_space<vmem>>, %arg1: memref<3x4x1xf32, #tpu.memory_space<vmem>>, %arg2: memref<2x8x256xf32, #tpu.memory_space<vmem>>) attributes {dimension_semantics = [], scalar_prefetch = 0 : i64, scratch_operands = 0 : i64, tpu.core_type = #tpu.core_type<tc>} {
    %c0 = arith.constant 0 : index
    %c0_0 = arith.constant 0 : index
    %c0_1 = arith.constant 0 : index
    %0 = vector.load %arg1[%c0, %c0_0, %c0_1] : memref<3x4x1xf32, #tpu.memory_space<vmem>>, vector<1x4x1xf32>
    %1 = vector.shape_cast %0 : vector<1x4x1xf32> to vector<4x1xf32>
    %c1 = arith.constant 1 : index
    %c0_2 = arith.constant 0 : index
    %c0_3 = arith.constant 0 : index
    %2 = vector.load %arg1[%c1, %c0_2, %c0_3] : memref<3x4x1xf32, #tpu.memory_space<vmem>>, vector<1x4x1xf32>
    %3 = vector.shape_cast %2 : vector<1x4x1xf32> to vector<4x1xf32>
    %c2 = arith.constant 2 : index
    %c0_4 = arith.constant 0 : index
    %c0_5 = arith.constant 0 : index
    %4 = vector.load %arg1[%c2, %c0_4, %c0_5] : memref<3x4x1xf32, #tpu.memory_space<vmem>>, vector<1x4x1xf32>
    %5 = vector.shape_cast %4 : vector<1x4x1xf32> to vector<4x1xf32>
    %c0_6 = arith.constant 0 : index
    %c0_7 = arith.constant 0 : index
    %c0_8 = arith.constant 0 : index
    %6 = vector.load %arg0[%c0_6, %c0_7, %c0_8] : memref<2x2x256xf32, #tpu.memory_space<vmem>>, vector<1x2x256xf32>
    %7 = vector.shape_cast %6 : vector<1x2x256xf32> to vector<2x256xf32>
    %cst = arith.constant dense<0.000000e+00> : vector<2xf32>
    %8 = vector.multi_reduction <add>, %7, %cst [1] : vector<2x256xf32> to vector<2xf32>
    %9 = vector.shape_cast %8 : vector<2xf32> to vector<2x1xf32>
    %cst_9 = arith.constant dense<0.000000e+00> : vector<1xf32>
    %10 = vector.multi_reduction <add>, %9, %cst_9 [0] : vector<2x1xf32> to vector<1xf32>
    %11 = vector.shape_cast %10 : vector<1xf32> to vector<1x1xf32>
    %cst_10 = arith.constant 0.001953125 : f32
    %12 = vector.broadcast %cst_10 : f32 to vector<1x1xf32>
    %13 = arith.mulf %11, %12 : vector<1x1xf32>
    %14 = vector.broadcast %13 : vector<1x1xf32> to vector<2x256xf32>
    %15 = arith.subf %7, %14 : vector<2x256xf32>
    %16 = arith.mulf %15, %15 : vector<2x256xf32>
    %cst_11 = arith.constant dense<0.000000e+00> : vector<2xf32>
    %17 = vector.multi_reduction <add>, %16, %cst_11 [1] : vector<2x256xf32> to vector<2xf32>
    %18 = vector.shape_cast %17 : vector<2xf32> to vector<2x1xf32>
    %cst_12 = arith.constant dense<0.000000e+00> : vector<1xf32>
    %19 = vector.multi_reduction <add>, %18, %cst_12 [0] : vector<2x1xf32> to vector<1xf32>
    %20 = vector.shape_cast %19 : vector<1xf32> to vector<1x1xf32>
    %cst_13 = arith.constant 0.001953125 : f32
    %21 = vector.broadcast %cst_13 : f32 to vector<1x1xf32>
    %22 = arith.mulf %20, %21 : vector<1x1xf32>
    %23 = arith.mulf %3, %1 : vector<4x1xf32>
    %24 = arith.mulf %1, %1 : vector<4x1xf32>
    %25 = vector.broadcast %22 : vector<1x1xf32> to vector<4x1xf32>
    %26 = arith.mulf %24, %25 : vector<4x1xf32>
    %cst_14 = arith.constant 9.99999974E-6 : f32
    %27 = vector.broadcast %cst_14 : f32 to vector<4x1xf32>
    %28 = arith.addf %26, %27 : vector<4x1xf32>
    %29 = math.rsqrt %28 : vector<4x1xf32>
    %30 = arith.mulf %23, %29 : vector<4x1xf32>
    %31 = vector.extract_strided_slice %15 {offsets = [0, 0], sizes = [1, 256], strides = [1, 1]} : vector<2x256xf32> to vector<1x256xf32>
    %32 = vector.broadcast %30 : vector<4x1xf32> to vector<4x256xf32>
    %33 = vector.broadcast %31 : vector<1x256xf32> to vector<4x256xf32>
    %34 = arith.mulf %32, %33 : vector<4x256xf32>
    %35 = vector.broadcast %5 : vector<4x1xf32> to vector<4x256xf32>
    %36 = arith.addf %34, %35 : vector<4x256xf32>
    %37 = vector.extract_strided_slice %15 {offsets = [1, 0], sizes = [1, 256], strides = [1, 1]} : vector<2x256xf32> to vector<1x256xf32>
    %38 = vector.broadcast %30 : vector<4x1xf32> to vector<4x256xf32>
    %39 = vector.broadcast %37 : vector<1x256xf32> to vector<4x256xf32>
    %40 = arith.mulf %38, %39 : vector<4x256xf32>
    %41 = vector.broadcast %5 : vector<4x1xf32> to vector<4x256xf32>
    %42 = arith.addf %40, %41 : vector<4x256xf32>
    %43 = tpu.concatenate %36, %42 in 0 : vector<4x256xf32>, vector<4x256xf32> -> vector<8x256xf32>
    %cst_15 = arith.constant 0.000000e+00 : f32
    %44 = vector.broadcast %cst_15 : f32 to vector<8x256xf32>
    %45 = arith.maximumf %43, %44 : vector<8x256xf32>
    %c0_16 = arith.constant 0 : index
    %c0_17 = arith.constant 0 : index
    %c0_18 = arith.constant 0 : index
    %46 = vector.load %arg2[%c0_16, %c0_17, %c0_18] : memref<2x8x256xf32, #tpu.memory_space<vmem>>, vector<1x8x256xf32>
    %47 = vector.shape_cast %46 : vector<1x8x256xf32> to vector<8x256xf32>
    %48 = vector.shape_cast %45 : vector<8x256xf32> to vector<1x8x256xf32>
    tpu.vector_store %arg2[%c0_16, %c0_17, %c0_18], %48 {strides = array<i32>} : memref<2x8x256xf32, #tpu.memory_space<vmem>>, vector<1x8x256xf32>,
    %c1_19 = arith.constant 1 : index
    %c0_20 = arith.constant 0 : index
    %c0_21 = arith.constant 0 : index
    %49 = vector.load %arg0[%c1_19, %c0_20, %c0_21] : memref<2x2x256xf32, #tpu.memory_space<vmem>>, vector<1x2x256xf32>
    %50 = vector.shape_cast %49 : vector<1x2x256xf32> to vector<2x256xf32>
    %cst_22 = arith.constant dense<0.000000e+00> : vector<2xf32>
    %51 = vector.multi_reduction <add>, %50, %cst_22 [1] : vector<2x256xf32> to vector<2xf32>
    %52 = vector.shape_cast %51 : vector<2xf32> to vector<2x1xf32>
    %cst_23 = arith.constant dense<0.000000e+00> : vector<1xf32>
    %53 = vector.multi_reduction <add>, %52, %cst_23 [0] : vector<2x1xf32> to vector<1xf32>
    %54 = vector.shape_cast %53 : vector<1xf32> to vector<1x1xf32>
    %cst_24 = arith.constant 0.001953125 : f32
    %55 = vector.broadcast %cst_24 : f32 to vector<1x1xf32>
    %56 = arith.mulf %54, %55 : vector<1x1xf32>
    %57 = vector.broadcast %56 : vector<1x1xf32> to vector<2x256xf32>
    %58 = arith.subf %50, %57 : vector<2x256xf32>
    %59 = arith.mulf %58, %58 : vector<2x256xf32>
    %cst_25 = arith.constant dense<0.000000e+00> : vector<2xf32>
    %60 = vector.multi_reduction <add>, %59, %cst_25 [1] : vector<2x256xf32> to vector<2xf32>
    %61 = vector.shape_cast %60 : vector<2xf32> to vector<2x1xf32>
    %cst_26 = arith.constant dense<0.000000e+00> : vector<1xf32>
    %62 = vector.multi_reduction <add>, %61, %cst_26 [0] : vector<2x1xf32> to vector<1xf32>
    %63 = vector.shape_cast %62 : vector<1xf32> to vector<1x1xf32>
    %cst_27 = arith.constant 0.001953125 : f32
    %64 = vector.broadcast %cst_27 : f32 to vector<1x1xf32>
    %65 = arith.mulf %63, %64 : vector<1x1xf32>
    %66 = arith.mulf %3, %1 : vector<4x1xf32>
    %67 = arith.mulf %1, %1 : vector<4x1xf32>
    %68 = vector.broadcast %65 : vector<1x1xf32> to vector<4x1xf32>
    %69 = arith.mulf %67, %68 : vector<4x1xf32>
    %cst_28 = arith.constant 9.99999974E-6 : f32
    %70 = vector.broadcast %cst_28 : f32 to vector<4x1xf32>
    %71 = arith.addf %69, %70 : vector<4x1xf32>
    %72 = math.rsqrt %71 : vector<4x1xf32>
    %73 = arith.mulf %66, %72 : vector<4x1xf32>
    %74 = vector.extract_strided_slice %58 {offsets = [0, 0], sizes = [1, 256], strides = [1, 1]} : vector<2x256xf32> to vector<1x256xf32>
    %75 = vector.broadcast %73 : vector<4x1xf32> to vector<4x256xf32>
    %76 = vector.broadcast %74 : vector<1x256xf32> to vector<4x256xf32>
    %77 = arith.mulf %75, %76 : vector<4x256xf32>
    %78 = vector.broadcast %5 : vector<4x1xf32> to vector<4x256xf32>
    %79 = arith.addf %77, %78 : vector<4x256xf32>
    %80 = vector.extract_strided_slice %58 {offsets = [1, 0], sizes = [1, 256], strides = [1, 1]} : vector<2x256xf32> to vector<1x256xf32>
    %81 = vector.broadcast %73 : vector<4x1xf32> to vector<4x256xf32>
    %82 = vector.broadcast %80 : vector<1x256xf32> to vector<4x256xf32>
    %83 = arith.mulf %81, %82 : vector<4x256xf32>
    %84 = vector.broadcast %5 : vector<4x1xf32> to vector<4x256xf32>
    %85 = arith.addf %83, %84 : vector<4x256xf32>
    %86 = tpu.concatenate %79, %85 in 0 : vector<4x256xf32>, vector<4x256xf32> -> vector<8x256xf32>
    %cst_29 = arith.constant 0.000000e+00 : f32
    %87 = vector.broadcast %cst_29 : f32 to vector<8x256xf32>
    %88 = arith.maximumf %86, %87 : vector<8x256xf32>
    %c1_30 = arith.constant 1 : index
    %c0_31 = arith.constant 0 : index
    %c0_32 = arith.constant 0 : index
    %89 = vector.load %arg2[%c1_30, %c0_31, %c0_32] : memref<2x8x256xf32, #tpu.memory_space<vmem>>, vector<1x8x256xf32>
    %90 = vector.shape_cast %89 : vector<1x8x256xf32> to vector<8x256xf32>
    %91 = vector.shape_cast %88 : vector<8x256xf32> to vector<1x8x256xf32>
    tpu.vector_store %arg2[%c1_30, %c0_31, %c0_32], %91 {strides = array<i32>} : memref<2x8x256xf32, #tpu.memory_space<vmem>>, vector<1x8x256xf32>,
    return
  }
}

</mosaic_0001>

<llo_original>
// kernel: tpu_custom_call.1
$region0: #{tpu_custom_call.1}
  #allocation0 [shape = 'u32[]', space=smem, size = 0x4, offset = 0x4, fixed_abs, tag = 'smem constant byte address 0x4 - core index']
  #allocation1 [shape = 'u32[144,128]{1,0:T(1,128)}', space=vmem, size = 0x12000, scoped, tag = 'internal scratch']
  %s0 = inlined_call_operand.vmem [shape: f32[2,2,256], index: 0, kind: input, shape index: {}]
  %s1 = inlined_call_operand.vmem [shape: f32[3,4,1], index: 1, kind: input, shape index: {}]
  %s2 = inlined_call_operand.hbm [shape: f32[2,8,256], index: 2, kind: output, shape index: {}]
  %s3 = sld [smem:[#allocation0]]
  $region18: #{tpu_custom_call.1} parent=0
    _
  %s5 = ssub.s32 1, %s3
  %s6 = scalar_select 0, %s5, %s3
  $region1: #{tpu_custom_call.1} parent=0
    #allocation2 [shape = 'u8[16384]{0}', space=vmem, size = 0x4000, scoped, tag = 'output window, operand 0, single buffered']
    #allocation3 [shape = 's32[1]{0}', space=sflag, size = 0x4, scoped, tag = 'scoped memory for tpu_custom_call.1']
    %7 = vsyncpa [#allocation3], 0
    // Predicated region
    $region2: #{tpu_custom_call.1} parent=1 // pred_check
      _
    $region3: #{tpu_custom_call.1} parent=1 // pred_check_branch
      %9 = sbr.rel (0) target = $region5
    $region4: #{tpu_custom_call.1} parent=1 // pred_region
      _
    $region5: #{tpu_custom_call.1} parent=1 // pred_fallthru
      _
    // Predicated region
    $region6: #{tpu_custom_call.1} parent=1 // pred_check
      _
    $region7: #{tpu_custom_call.1} parent=1 // pred_check_branch
      %11 = sbr.rel (0) target = $region9
    $region8: #{tpu_custom_call.1} parent=1 // pred_region
      _
    $region9: #{tpu_custom_call.1} parent=1 // pred_fallthru
      _
    %v12 = vld [vmem:[%s1] sm:$0xf]
    %s13 = scalar_lea.vmem %s1, 4
    %v14 = vld [vmem:[%s13] sm:$0xf]
    %s15 = scalar_lea.vmem %s1, 8
    %v16 = vld [vmem:[%s15] sm:$0xf]
    %v17 = vld [vmem:[%s0] sm:$0xf]
    %v20 = vunpack.c.l.s4 1983009808
    %v21 = vunpack.c.0.s8 %v20
    %v22 = vlaneseq
    %v23 = vshrl.u32 %v22, 7
    %v24 = vsub.s32 %v21, %v23
    %v25 = vrot.slane %v17, %v24
    %v26 = vcombine.high %v25, %v25
    %vm29 = vcmask 1041408
    %v30 = vsel %vm29, %v25, 0.0
    %v31 = vsel %vm29, %v26, 0.0
    %v32 = vadd.f32 %v30, %v31
    %33 = vadd.xlane.f32.xlu0 %v32
    %v34 = vpop.xlane.xlu0 %33
    %v35 = vsel %vm29, %v34, 0.0
    %v36 = vrot.slane %v35, 4
    %v37 = vadd.f32 %v35, %v36
    %v38 = vrot.slane %v37, 2
    %v39 = vadd.f32 %v37, %v38
    %v40 = vrot.slane %v39, 1
    %v41 = vadd.f32 %v39, %v40
    %v42 = vmul.f32 %v41, 0.001953125
    %v43 = vsub.f32 %v17, %v42
    %v44 = vmul.f32 %v43, %v43
    %v47 = vunpack.c.l.s4 1983009808
    %v48 = vunpack.c.0.s8 %v47
    %v49 = vlaneseq
    %v50 = vshrl.u32 %v49, 7
    %v51 = vsub.s32 %v48, %v50
    %v52 = vrot.slane %v44, %v51
    %v53 = vcombine.high %v52, %v52
    %v56 = vsel %vm29, %v52, 0.0
    %v57 = vsel %vm29, %v53, 0.0
    %v58 = vadd.f32 %v56, %v57
    %59 = vadd.xlane.f32.xlu0 %v58
    %v60 = vpop.xlane.xlu0 %59
    %v61 = vsel %vm29, %v60, 0.0
    %v62 = vrot.slane %v61, 4
    %v63 = vadd.f32 %v61, %v62
    %v64 = vrot.slane %v63, 2
    %v65 = vadd.f32 %v63, %v64
    %v66 = vrot.slane %v65, 1
    %v67 = vadd.f32 %v65, %v66
    %v68 = vmul.f32 %v67, 0.001953125
    %v69 = vmul.f32 %v14, %v12
    %v70 = vmul.f32 %v12, %v12
    %v71 = vmul.f32 %v70, %v68
    %v72 = vadd.f32 %v71, 1e-05
    %v73 = vrsqrt.pop %v72
    %v74 = vmul.f32 %v69, %v73
    %76 = vset.pattern.permute.xlu0 0
    %77 = vperm.xlu0 %76, %v74
    %v78 = vpop.permute.xlu0 %77
    %v81 = vlaneseq
    %v82 = vshrl.u32 %v81, 7
    %v83 = vsub.s32 0, %v82
    %v84 = vrot.slane %v43, %v83
    %v85 = vlaneseq
    %v86 = vshrl.u32 %v85, 7
    %v87 = vsub.s32 2, %v86
    %v88 = vrot.slane %v43, %v87
    %v91 = vlaneseq
    %v92 = vshrl.u32 %v91, 7
    %v93 = vsub.s32 0, %v92
    %v94 = vrot.slane %v84, %v93
    %v95 = vlaneseq
    %v96 = vshrl.u32 %v95, 7
    %v97 = vsub.s32 0, %v96
    %v98 = vrot.slane %v88, %v97
    %v99 = vmul.f32 %v78, %v94
    %v100 = vmul.f32 %v78, %v98
    %102 = vset.pattern.permute.xlu0 0
    %103 = vperm.xlu0 %102, %v16
    %v104 = vpop.permute.xlu0 %103
    %v106 = vadd.f32 %v99, %v104
    %v107 = vadd.f32 %v100, %v104
    %v108 = vlaneseq
    %v109 = vshrl.u32 %v108, 7
    %v110 = vsub.s32 1, %v109
    %v111 = vrot.slane %v43, %v110
    %v112 = vlaneseq
    %v113 = vshrl.u32 %v112, 7
    %v114 = vsub.s32 3, %v113
    %v115 = vrot.slane %v43, %v114
    %v118 = vlaneseq
    %v119 = vshrl.u32 %v118, 7
    %v120 = vsub.s32 1, %v119
    %v121 = vrot.slane %v111, %v120
    %v122 = vlaneseq
    %v123 = vshrl.u32 %v122, 7
    %v124 = vsub.s32 1, %v123
    %v125 = vrot.slane %v115, %v124
    %v126 = vmul.f32 %v78, %v121
    %v127 = vmul.f32 %v78, %v125
    %v128 = vadd.f32 %v126, %v104
    %v129 = vadd.f32 %v127, %v104
    %v132 = vrot.slane %v128, 4
    %v133 = vrot.slane %v129, 4
    %vm136 = vcmask 1043456
    %v137 = vsel %vm136, %v106, %v132
    %v138 = vsel %vm136, %v107, %v133
    %v139 = vmax.f32 %v137, 0.0
    %v140 = vmax.f32 %v138, 0.0
    %141 = vst [vmem:[#allocation2] sm:$0xff] %v139
    %142 = vst [vmem:[#allocation2 + $0x8] sm:$0xff] %v140
    %s143 = scalar_lea.vmem %s0, 4
    %v144 = vld [vmem:[%s143] sm:$0xf]
    %v147 = vunpack.c.l.s4 1983009808
    %v148 = vunpack.c.0.s8 %v147
    %v149 = vlaneseq
    %v150 = vshrl.u32 %v149, 7
    %v151 = vsub.s32 %v148, %v150
    %v152 = vrot.slane %v144, %v151
    %v153 = vcombine.high %v152, %v152
    %v156 = vsel %vm29, %v152, 0.0
    %v157 = vsel %vm29, %v153, 0.0
    %v158 = vadd.f32 %v156, %v157
    %159 = vadd.xlane.f32.xlu0 %v158
    %v160 = vpop.xlane.xlu0 %159
    %v161 = vsel %vm29, %v160, 0.0
    %v162 = vrot.slane %v161, 4
    %v163 = vadd.f32 %v161, %v162
    %v164 = vrot.slane %v163, 2
    %v165 = vadd.f32 %v163, %v164
    %v166 = vrot.slane %v165, 1
    %v167 = vadd.f32 %v165, %v166
    %v168 = vmul.f32 %v167, 0.001953125
    %v169 = vsub.f32 %v144, %v168
    %v170 = vmul.f32 %v169, %v169
    %v173 = vunpack.c.l.s4 1983009808
    %v174 = vunpack.c.0.s8 %v173
    %v175 = vlaneseq
    %v176 = vshrl.u32 %v175, 7
    %v177 = vsub.s32 %v174, %v176
    %v178 = vrot.slane %v170, %v177
    %v179 = vcombine.high %v178, %v178
    %v182 = vsel %vm29, %v178, 0.0
    %v183 = vsel %vm29, %v179, 0.0
    %v184 = vadd.f32 %v182, %v183
    %185 = vadd.xlane.f32.xlu0 %v184
    %v186 = vpop.xlane.xlu0 %185
    %v187 = vsel %vm29, %v186, 0.0
    %v188 = vrot.slane %v187, 4
    %v189 = vadd.f32 %v187, %v188
    %v190 = vrot.slane %v189, 2
    %v191 = vadd.f32 %v189, %v190
    %v192 = vrot.slane %v191, 1
    %v193 = vadd.f32 %v191, %v192
    %v194 = vmul.f32 %v193, 0.001953125
    %v195 = vmul.f32 %v70, %v194
    %v196 = vadd.f32 %v195, 1e-05
    %v197 = vrsqrt.pop %v196
    %v198 = vmul.f32 %v69, %v197
    %200 = vset.pattern.permute.xlu0 0
    %201 = vperm.xlu0 %200, %v198
    %v202 = vpop.permute.xlu0 %201
    %v205 = vlaneseq
    %v206 = vshrl.u32 %v205, 7
    %v207 = vsub.s32 0, %v206
    %v208 = vrot.slane %v169, %v207
    %v209 = vlaneseq
    %v210 = vshrl.u32 %v209, 7
    %v211 = vsub.s32 2, %v210
    %v212 = vrot.slane %v169, %v211
    %v215 = vlaneseq
    %v216 = vshrl.u32 %v215, 7
    %v217 = vsub.s32 0, %v216
    %v218 = vrot.slane %v208, %v217
    %v219 = vlaneseq
    %v220 = vshrl.u32 %v219, 7
    %v221 = vsub.s32 0, %v220
    %v222 = vrot.slane %v212, %v221
    %v223 = vmul.f32 %v202, %v218
    %v224 = vmul.f32 %v202, %v222
    %v225 = vadd.f32 %v223, %v104
    %v226 = vadd.f32 %v224, %v104
    %v227 = vlaneseq
    %v228 = vshrl.u32 %v227, 7
    %v229 = vsub.s32 1, %v228
    %v230 = vrot.slane %v169, %v229
    %v231 = vlaneseq
    %v232 = vshrl.u32 %v231, 7
    %v233 = vsub.s32 3, %v232
    %v234 = vrot.slane %v169, %v233
    %v237 = vlaneseq
    %v238 = vshrl.u32 %v237, 7
    %v239 = vsub.s32 1, %v238
    %v240 = vrot.slane %v230, %v239
    %v241 = vlaneseq
    %v242 = vshrl.u32 %v241, 7
    %v243 = vsub.s32 1, %v242
    %v244 = vrot.slane %v234, %v243
    %v245 = vmul.f32 %v202, %v240
    %v246 = vmul.f32 %v202, %v244
    %v247 = vadd.f32 %v245, %v104
    %v248 = vadd.f32 %v246, %v104
    %v251 = vrot.slane %v247, 4
    %v252 = vrot.slane %v248, 4
    %v255 = vsel %vm136, %v225, %v251
    %v256 = vsel %vm136, %v226, %v252
    %v257 = vmax.f32 %v255, 0.0
    %v258 = vmax.f32 %v256, 0.0
    %s259 = scalar_lea.vmem [#allocation2], 16
    %260 = vst [vmem:[%s259] sm:$0xff] %v257
    %261 = vst [vmem:[%s259 + $0x8] sm:$0xff] %v258
    // Predicated region
    $region10: #{tpu_custom_call.1} parent=1 // pred_check
      _
    $region11: #{tpu_custom_call.1} parent=1 // pred_check_branch
      %263 = sbr.rel (0) target = $region13
    $region12: #{tpu_custom_call.1} parent=1 // pred_region
      %s265 = ssub.s32 512, 512
      %266 = vsyncadd [#allocation3], %s265
      %s267 = sshll.u32 [#allocation2], 4
      %s268 = int_to_ptr.vmem [resolvable:$true] %s267
      %273 = dma.vmem_to_hbm [thread:$0]  %s268, 512, %s2, [#allocation3], 256, 256, 16
    $region13: #{tpu_custom_call.1} parent=1 // pred_fallthru
      _
    // Predicated region
    $region14: #{tpu_custom_call.1} parent=1 // pred_check
      _
    $region15: #{tpu_custom_call.1} parent=1 // pred_check_branch
      %275 = sbr.rel (0) target = $region17
    $region16: #{tpu_custom_call.1} parent=1 // pred_region
      %276 = dma.done [#allocation3], 512
    $region17: #{tpu_custom_call.1} parent=1 // pred_fallthru
      _
    %277 = vsyncpa [#allocation3], 1

</llo_original>
